<compile_context>
chip_gen: v7x
topology: tpu7x:2x2x1
jax: 0.10.0
libtpu: 0.0.40
codegen_flags: <defaults>
</compile_context>

<pallas_src>
import jax
import jax.numpy as jnp
from jax.experimental import pallas as pl
from jax.experimental.pallas import tpu as pltpu

EPS = 1e-8  # F.cosine_similarity default eps


def _cosine_attn_kernel(x_ref, z_ref, wbig_ref, bbig_ref, wiT_ref, bi_ref,
                        e_ref, r_ref, t_ref, s_ref, ctx_ref, alpha_ref):
    x = x_ref[...]                                                    # (TB, F*L)

    # q = z @ W_inp^T + b_inp                                         -> (TB, A)
    q = jnp.dot(z_ref[...], wiT_ref[...],
                preferred_element_type=jnp.float32) + bi_ref[...]

    # a_flat[b, a*L + l] = (W_feat @ feat[b, :, l] + b_feat)[a]       -> (TB, A*L)
    a_flat = jnp.dot(x, wbig_ref[...],
                     preferred_element_type=jnp.float32) + bbig_ref[...]

    # Broadcast q over positions:  q_exp[b, a*L + l] = q[b, a]        -> (TB, A*L)
    q_exp = jnp.dot(q, e_ref[...], preferred_element_type=jnp.float32)

    # dot[b, l]  = sum_a a[b,a,l] * q[b,a]
    # a_sq[b, l] = sum_a a[b,a,l]^2
    dot = jnp.dot(a_flat * q_exp, r_ref[...],
                  preferred_element_type=jnp.float32)                 # (TB, L)
    a_sq = jnp.dot(a_flat * a_flat, r_ref[...],
                   preferred_element_type=jnp.float32)                # (TB, L)
    q_sq = jnp.sum(q * q, axis=-1, keepdims=True)                     # (TB, 1)

    # Cosine similarity: dot / (max(||a||, eps) * max(||q||, eps))
    inv_a = jnp.minimum(jax.lax.rsqrt(a_sq), 1.0 / EPS)
    inv_q = jnp.minimum(jax.lax.rsqrt(q_sq), 1.0 / EPS)
    sim = dot * inv_a * inv_q                                         # (TB, L)

    # Softmax over L (lane axis).
    m = jnp.max(sim, axis=-1, keepdims=True)
    e = jnp.exp(sim - m)
    alpha = e / jnp.sum(e, axis=-1, keepdims=True)                    # (TB, L)

    # ctx[b, f] = sum_l feat[b,f,l] * alpha[b,l]     (te.bmv)
    alpha_exp = jnp.dot(alpha, t_ref[...],
                        preferred_element_type=jnp.float32)           # (TB, F*L)
    ctx = jnp.dot(x * alpha_exp, s_ref[...],
                  preferred_element_type=jnp.float32)                 # (TB, F)

    ctx_ref[...] = ctx
    alpha_ref[...] = alpha


def cosine_attention(z, features, w_feat, b_feat, w_inp, b_inp, *, block_b=1024):
    """z: (B, input_size); features: (B, feat_size, L) in native layout.
    Returns (ctx: (B, feat_size), alpha: (B, L)) like the PyTorch module."""
    B, F_, L = features.shape
    D_in = z.shape[1]
    A = w_feat.shape[0]
    FL = F_ * L
    AL = A * L

    # ---- batch tiling -------------------------------------------------------
    if B <= 8:
        tb = B                                   # single block == full dim
    elif B <= block_b:
        if B % 16 == 0:
            tb = B // 2                          # 2 blocks -> both v7x TCs busy
        else:
            tb = B                               # single block == full dim
    else:
        n = pl.cdiv(B, block_b)
        tb = ((pl.cdiv(B, n) + 7) // 8) * 8      # balanced, multiple of 8
    n_blk = pl.cdiv(B, tb)
    b_pad = n_blk * tb

    # Lane-dense features: free contiguous reshape of the native (B, F, L) layout.
    x = features.reshape(B, FL)
    if b_pad != B:
        x = jnp.pad(x, ((0, b_pad - B), (0, 0)))
        z = jnp.pad(z, ((0, b_pad - B), (0, 0)))

    # ---- small resident matrices (built once, constant block index) ---------
    f32 = jnp.float32
    eye_l = jnp.eye(L, dtype=f32)
    # W_big[f*L + l', a*L + l] = W_feat[a, f] * (l' == l)
    w_big = (w_feat.T.astype(f32)[:, None, :, None]
             * eye_l[None, :, None, :]).reshape(FL, AL)
    b_big = jnp.repeat(b_feat.astype(f32), L)[None, :]                 # (1, A*L)
    e_mat = jnp.repeat(jnp.eye(A, dtype=f32), L, axis=1)               # (A, A*L)
    r_mat = jnp.tile(eye_l, (A, 1))                                    # (A*L, L)
    t_mat = jnp.tile(eye_l, (1, F_))                                   # (L, F*L)
    s_mat = jnp.repeat(jnp.eye(F_, dtype=f32), L, axis=0)              # (F*L, F)
    wiT = w_inp.T.astype(f32)                                          # (D_in, A)
    bi = b_inp.astype(f32)[None, :]                                    # (1, A)

    # ---- cost hint (advisory) ------------------------------------------------
    flops = 2 * b_pad * (D_in * A + FL * AL + A * AL + 2 * AL * L + L * FL + FL * F_)
    bytes_accessed = 4 * (b_pad * (FL + D_in + F_ + L)
                          + FL * AL + AL + D_in * A + A + A * AL + AL * L
                          + L * FL + FL * F_)
    cost = pl.CostEstimate(flops=flops, transcendentals=3 * b_pad * L,
                           bytes_accessed=bytes_accessed)

    ctx, alpha = pl.pallas_call(
        _cosine_attn_kernel,
        out_shape=(
            jax.ShapeDtypeStruct((b_pad, F_), jnp.float32),
            jax.ShapeDtypeStruct((b_pad, L), jnp.float32),
        ),
        grid_spec=pltpu.PrefetchScalarGridSpec(
            num_scalar_prefetch=0,
            grid=(n_blk,),
            in_specs=[
                pl.BlockSpec((tb, FL), lambda i: (i, 0)),      # features (lane-dense)
                pl.BlockSpec((tb, D_in), lambda i: (i, 0)),    # z
                pl.BlockSpec((FL, AL), lambda i: (0, 0)),      # W_big    (resident)
                pl.BlockSpec((1, AL), lambda i: (0, 0)),       # b_big    (resident)
                pl.BlockSpec((D_in, A), lambda i: (0, 0)),     # W_inp^T  (resident)
                pl.BlockSpec((1, A), lambda i: (0, 0)),        # b_inp    (resident)
                pl.BlockSpec((A, AL), lambda i: (0, 0)),       # E        (resident)
                pl.BlockSpec((AL, L), lambda i: (0, 0)),       # R        (resident)
                pl.BlockSpec((L, FL), lambda i: (0, 0)),       # T        (resident)
                pl.BlockSpec((FL, F_), lambda i: (0, 0)),      # S        (resident)
            ],
            out_specs=[
                pl.BlockSpec((tb, F_), lambda i: (i, 0)),      # ctx   (2-D)
                pl.BlockSpec((tb, L), lambda i: (i, 0)),       # alpha (2-D)
            ],
        ),
        compiler_params=pltpu.CompilerParams(
            dimension_semantics=("parallel",),
            vmem_limit_bytes=32 * 1024 * 1024,
        ),
        cost_estimate=cost,
    )(x, z, w_big, b_big, wiT, bi, e_mat, r_mat, t_mat, s_mat)

    return ctx[:B], alpha[:B]


def _reference(z, features, w_feat, b_feat, w_inp, b_inp):
    tf = jnp.transpose(features, (0, 2, 1))
    a = tf @ w_feat.T + b_feat                        # (B, L, A)
    q = (z @ w_inp.T + b_inp)[:, None, :]             # (B, 1, A)
    a_n = a / jnp.maximum(jnp.linalg.norm(a, axis=-1, keepdims=True), EPS)
    q_n = q / jnp.maximum(jnp.linalg.norm(q, axis=-1, keepdims=True), EPS)
    sim = jnp.sum(a_n * q_n, axis=-1)                 # (B, L)
    alpha = jax.nn.softmax(sim, axis=-1)
    ctx = jnp.einsum('bfl,bl->bf', features, alpha)   # te.bmv
    return ctx, alpha


if __name__ == "__main__":
    B, input_size, feat_size, attn_size, L = 2, 32, 8, 16, 16

    key = jax.random.PRNGKey(0)
    ks = jax.random.split(key, 4)
    z = jax.random.normal(ks[0], (B, input_size), jnp.float32)
    features = jax.random.normal(ks[1], (B, feat_size, L), jnp.float32)

    # Deterministic nn.Linear-style init (uniform(-1/sqrt(fan_in), 1/sqrt(fan_in))).
    def lin_init(k, out_f, in_f):
        bound = 1.0 / (in_f ** 0.5)
        kw, kb = jax.random.split(k)
        w = jax.random.uniform(kw, (out_f, in_f), jnp.float32, -bound, bound)
        b = jax.random.uniform(kb, (out_f,), jnp.float32, -bound, bound)
        return w, b

    w_feat, b_feat = lin_init(ks[2], attn_size, feat_size)
    w_inp, b_inp = lin_init(ks[3], attn_size, input_size)

    ctx, alpha = cosine_attention(z, features, w_feat, b_feat, w_inp, b_inp)
    jax.block_until_ready((ctx, alpha))

    ctx_ref, alpha_ref = _reference(z, features, w_feat, b_feat, w_inp, b_inp)
    assert ctx.shape == (B, feat_size) and alpha.shape == (B, L)
    assert jnp.allclose(ctx, ctx_ref, atol=1e-4, rtol=1e-3)
    assert jnp.allclose(alpha, alpha_ref, atol=1e-5, rtol=1e-3)

    print("KERNEL_OK")
</pallas_src>

<mosaic_0001>
module attributes {stable_mosaic.version = 11 : i64} {
  func.func @_cosine_attn_kernel(%arg0: i32, %arg1: memref<2x128xf32, #tpu.memory_space<vmem>>, %arg2: memref<2x32xf32, #tpu.memory_space<vmem>>, %arg3: memref<128x256xf32, #tpu.memory_space<vmem>>, %arg4: memref<1x256xf32, #tpu.memory_space<vmem>>, %arg5: memref<32x16xf32, #tpu.memory_space<vmem>>, %arg6: memref<1x16xf32, #tpu.memory_space<vmem>>, %arg7: memref<16x256xf32, #tpu.memory_space<vmem>>, %arg8: memref<256x16xf32, #tpu.memory_space<vmem>>, %arg9: memref<16x128xf32, #tpu.memory_space<vmem>>, %arg10: memref<128x8xf32, #tpu.memory_space<vmem>>, %arg11: memref<2x8xf32, #tpu.memory_space<vmem>>, %arg12: memref<2x16xf32, #tpu.memory_space<vmem>>) attributes {dimension_semantics = [#tpu.dimension_semantics<parallel>], iteration_bounds = array<i64: 1>, scalar_prefetch = 0 : i64, scratch_operands = 0 : i64, tpu.core_type = #tpu.core_type<tc>, window_params = [{transform_indices = @transform_0, window_bounds = array<i64: 2, 128>}, {transform_indices = @transform_1, window_bounds = array<i64: 2, 32>}, {pipeline_mode = #tpu.pipeline_mode<synchronous>, transform_indices = @transform_2, window_bounds = array<i64: 128, 256>}, {pipeline_mode = #tpu.pipeline_mode<synchronous>, transform_indices = @transform_3, window_bounds = array<i64: 1, 256>}, {pipeline_mode = #tpu.pipeline_mode<synchronous>, transform_indices = @transform_4, window_bounds = array<i64: 32, 16>}, {pipeline_mode = #tpu.pipeline_mode<synchronous>, transform_indices = @transform_5, window_bounds = array<i64: 1, 16>}, {pipeline_mode = #tpu.pipeline_mode<synchronous>, transform_indices = @transform_6, window_bounds = array<i64: 16, 256>}, {pipeline_mode = #tpu.pipeline_mode<synchronous>, transform_indices = @transform_7, window_bounds = array<i64: 256, 16>}, {pipeline_mode = #tpu.pipeline_mode<synchronous>, transform_indices = @transform_8, window_bounds = array<i64: 16, 128>}, {pipeline_mode = #tpu.pipeline_mode<synchronous>, transform_indices = @transform_9, window_bounds = array<i64: 128, 8>}, {transform_indices = @transform_10, window_bounds = array<i64: 2, 8>}, {transform_indices = @transform_11, window_bounds = array<i64: 2, 16>}]} {
    %c0 = arith.constant 0 : index
    %c0_0 = arith.constant 0 : index
    %0 = vector.load %arg1[%c0, %c0_0] : memref<2x128xf32, #tpu.memory_space<vmem>>, vector<2x128xf32>
    %c0_1 = arith.constant 0 : index
    %c0_2 = arith.constant 0 : index
    %1 = vector.load %arg2[%c0_1, %c0_2] : memref<2x32xf32, #tpu.memory_space<vmem>>, vector<2x32xf32>
    %c0_3 = arith.constant 0 : index
    %c0_4 = arith.constant 0 : index
    %2 = vector.load %arg5[%c0_3, %c0_4] : memref<32x16xf32, #tpu.memory_space<vmem>>, vector<32x16xf32>
    %cst = arith.constant dense<0.000000e+00> : vector<2x16xf32>
    %3 = tpu.matmul %1, %2, %cst {dimension_numbers = #tpu.dot_dimension_numbers<[1], [0], [0], [1], [0, 0, 1, 1], [], []>} : vector<2x32xf32>, vector<32x16xf32>, vector<2x16xf32> -> vector<2x16xf32>
    %c0_5 = arith.constant 0 : index
    %c0_6 = arith.constant 0 : index
    %4 = vector.load %arg6[%c0_5, %c0_6] : memref<1x16xf32, #tpu.memory_space<vmem>>, vector<1x16xf32>
    %5 = vector.broadcast %4 : vector<1x16xf32> to vector<2x16xf32>
    %6 = arith.addf %3, %5 : vector<2x16xf32>
    %c0_7 = arith.constant 0 : index
    %c0_8 = arith.constant 0 : index
    %7 = vector.load %arg3[%c0_7, %c0_8] : memref<128x256xf32, #tpu.memory_space<vmem>>, vector<128x256xf32>
    %cst_9 = arith.constant dense<0.000000e+00> : vector<2x256xf32>
    %8 = tpu.matmul %0, %7, %cst_9 {dimension_numbers = #tpu.dot_dimension_numbers<[1], [0], [0], [1], [0, 0, 1, 1], [], []>} : vector<2x128xf32>, vector<128x256xf32>, vector<2x256xf32> -> vector<2x256xf32>
    %c0_10 = arith.constant 0 : index
    %c0_11 = arith.constant 0 : index
    %9 = vector.load %arg4[%c0_10, %c0_11] : memref<1x256xf32, #tpu.memory_space<vmem>>, vector<1x256xf32>
    %10 = vector.broadcast %9 : vector<1x256xf32> to vector<2x256xf32>
    %11 = arith.addf %8, %10 : vector<2x256xf32>
    %c0_12 = arith.constant 0 : index
    %c0_13 = arith.constant 0 : index
    %12 = vector.load %arg7[%c0_12, %c0_13] : memref<16x256xf32, #tpu.memory_space<vmem>>, vector<16x256xf32>
    %cst_14 = arith.constant dense<0.000000e+00> : vector<2x256xf32>
    %13 = tpu.matmul %6, %12, %cst_14 {dimension_numbers = #tpu.dot_dimension_numbers<[1], [0], [0], [1], [0, 0, 1, 1], [], []>} : vector<2x16xf32>, vector<16x256xf32>, vector<2x256xf32> -> vector<2x256xf32>
    %14 = arith.mulf %11, %13 : vector<2x256xf32>
    %c0_15 = arith.constant 0 : index
    %c0_16 = arith.constant 0 : index
    %15 = vector.load %arg8[%c0_15, %c0_16] : memref<256x16xf32, #tpu.memory_space<vmem>>, vector<256x16xf32>
    %cst_17 = arith.constant dense<0.000000e+00> : vector<2x16xf32>
    %16 = tpu.matmul %14, %15, %cst_17 {dimension_numbers = #tpu.dot_dimension_numbers<[1], [0], [0], [1], [0, 0, 1, 1], [], []>} : vector<2x256xf32>, vector<256x16xf32>, vector<2x16xf32> -> vector<2x16xf32>
    %17 = arith.mulf %11, %11 : vector<2x256xf32>
    %c0_18 = arith.constant 0 : index
    %c0_19 = arith.constant 0 : index
    %18 = vector.load %arg8[%c0_18, %c0_19] : memref<256x16xf32, #tpu.memory_space<vmem>>, vector<256x16xf32>
    %cst_20 = arith.constant dense<0.000000e+00> : vector<2x16xf32>
    %19 = tpu.matmul %17, %18, %cst_20 {dimension_numbers = #tpu.dot_dimension_numbers<[1], [0], [0], [1], [0, 0, 1, 1], [], []>} : vector<2x256xf32>, vector<256x16xf32>, vector<2x16xf32> -> vector<2x16xf32>
    %20 = arith.mulf %6, %6 : vector<2x16xf32>
    %cst_21 = arith.constant dense<0.000000e+00> : vector<2xf32>
    %21 = vector.multi_reduction <add>, %20, %cst_21 [1] : vector<2x16xf32> to vector<2xf32>
    %22 = vector.shape_cast %21 : vector<2xf32> to vector<2x1xf32>
    %23 = math.rsqrt %19 : vector<2x16xf32>
    %cst_22 = arith.constant 1.000000e+08 : f32
    %24 = vector.broadcast %cst_22 : f32 to vector<2x16xf32>
    %25 = arith.minimumf %23, %24 : vector<2x16xf32>
    %26 = math.rsqrt %22 : vector<2x1xf32>
    %cst_23 = arith.constant 1.000000e+08 : f32
    %27 = vector.broadcast %cst_23 : f32 to vector<2x1xf32>
    %28 = arith.minimumf %26, %27 : vector<2x1xf32>
    %29 = arith.mulf %16, %25 : vector<2x16xf32>
    %30 = vector.broadcast %28 : vector<2x1xf32> to vector<2x16xf32>
    %31 = arith.mulf %29, %30 : vector<2x16xf32>
    %cst_24 = arith.constant dense<0xFF800000> : vector<2xf32>
    %32 = vector.multi_reduction <maximumf>, %31, %cst_24 [1] : vector<2x16xf32> to vector<2xf32>
    %33 = vector.shape_cast %32 : vector<2xf32> to vector<2x1xf32>
    %34 = vector.broadcast %33 : vector<2x1xf32> to vector<2x16xf32>
    %35 = arith.subf %31, %34 : vector<2x16xf32>
    %36 = math.exp %35 : vector<2x16xf32>
    %cst_25 = arith.constant dense<0.000000e+00> : vector<2xf32>
    %37 = vector.multi_reduction <add>, %36, %cst_25 [1] : vector<2x16xf32> to vector<2xf32>
    %38 = vector.shape_cast %37 : vector<2xf32> to vector<2x1xf32>
    %39 = vector.broadcast %38 : vector<2x1xf32> to vector<2x16xf32>
    %40 = arith.divf %36, %39 : vector<2x16xf32>
    %c0_26 = arith.constant 0 : index
    %c0_27 = arith.constant 0 : index
    %41 = vector.load %arg9[%c0_26, %c0_27] : memref<16x128xf32, #tpu.memory_space<vmem>>, vector<16x128xf32>
    %cst_28 = arith.constant dense<0.000000e+00> : vector<2x128xf32>
    %42 = tpu.matmul %40, %41, %cst_28 {dimension_numbers = #tpu.dot_dimension_numbers<[1], [0], [0], [1], [0, 0, 1, 1], [], []>} : vector<2x16xf32>, vector<16x128xf32>, vector<2x128xf32> -> vector<2x128xf32>
    %43 = arith.mulf %0, %42 : vector<2x128xf32>
    %c0_29 = arith.constant 0 : index
    %c0_30 = arith.constant 0 : index
    %44 = vector.load %arg10[%c0_29, %c0_30] : memref<128x8xf32, #tpu.memory_space<vmem>>, vector<128x8xf32>
    %cst_31 = arith.constant dense<0.000000e+00> : vector<2x8xf32>
    %45 = tpu.matmul %43, %44, %cst_31 {dimension_numbers = #tpu.dot_dimension_numbers<[1], [0], [0], [1], [0, 0, 1, 1], [], []>} : vector<2x128xf32>, vector<128x8xf32>, vector<2x8xf32> -> vector<2x8xf32>
    %c0_32 = arith.constant 0 : index
    %c0_33 = arith.constant 0 : index
    %46 = vector.load %arg11[%c0_32, %c0_33] : memref<2x8xf32, #tpu.memory_space<vmem>>, vector<2x8xf32>
    tpu.vector_store %arg11[%c0_32, %c0_33], %45 {strides = array<i32>} : memref<2x8xf32, #tpu.memory_space<vmem>>, vector<2x8xf32>,
    %c0_34 = arith.constant 0 : index
    %c0_35 = arith.constant 0 : index
    %47 = vector.load %arg12[%c0_34, %c0_35] : memref<2x16xf32, #tpu.memory_space<vmem>>, vector<2x16xf32>
    tpu.vector_store %arg12[%c0_34, %c0_35], %40 {strides = array<i32>} : memref<2x16xf32, #tpu.memory_space<vmem>>, vector<2x16xf32>,
    return
  }
  func.func @transform_0(%arg0: i32) -> (i32, i32) {
    %c0_i32 = arith.constant 0 : i32
    %c0_i32_0 = arith.constant 0 : i32
    return %arg0, %c0_i32 : i32, i32
  }
  func.func @transform_1(%arg0: i32) -> (i32, i32) {
    %c0_i32 = arith.constant 0 : i32
    %c0_i32_0 = arith.constant 0 : i32
    return %arg0, %c0_i32 : i32, i32
  }
  func.func @transform_2(%arg0: i32) -> (i32, i32) {
    %c0_i32 = arith.constant 0 : i32
    %c0_i32_0 = arith.constant 0 : i32
    %c0_i32_1 = arith.constant 0 : i32
    return %c0_i32, %c0_i32_0 : i32, i32
  }
  func.func @transform_3(%arg0: i32) -> (i32, i32) {
    %c0_i32 = arith.constant 0 : i32
    %c0_i32_0 = arith.constant 0 : i32
    %c0_i32_1 = arith.constant 0 : i32
    return %c0_i32, %c0_i32_0 : i32, i32
  }
  func.func @transform_4(%arg0: i32) -> (i32, i32) {
    %c0_i32 = arith.constant 0 : i32
    %c0_i32_0 = arith.constant 0 : i32
    %c0_i32_1 = arith.constant 0 : i32
    return %c0_i32, %c0_i32_0 : i32, i32
  }
  func.func @transform_5(%arg0: i32) -> (i32, i32) {
    %c0_i32 = arith.constant 0 : i32
    %c0_i32_0 = arith.constant 0 : i32
    %c0_i32_1 = arith.constant 0 : i32
    return %c0_i32, %c0_i32_0 : i32, i32
  }
  func.func @transform_6(%arg0: i32) -> (i32, i32) {
    %c0_i32 = arith.constant 0 : i32
    %c0_i32_0 = arith.constant 0 : i32
    %c0_i32_1 = arith.constant 0 : i32
    return %c0_i32, %c0_i32_0 : i32, i32
  }
  func.func @transform_7(%arg0: i32) -> (i32, i32) {
    %c0_i32 = arith.constant 0 : i32
    %c0_i32_0 = arith.constant 0 : i32
    %c0_i32_1 = arith.constant 0 : i32
    return %c0_i32, %c0_i32_0 : i32, i32
  }
  func.func @transform_8(%arg0: i32) -> (i32, i32) {
    %c0_i32 = arith.constant 0 : i32
    %c0_i32_0 = arith.constant 0 : i32
    %c0_i32_1 = arith.constant 0 : i32
    return %c0_i32, %c0_i32_0 : i32, i32
  }
  func.func @transform_9(%arg0: i32) -> (i32, i32) {
    %c0_i32 = arith.constant 0 : i32
    %c0_i32_0 = arith.constant 0 : i32
    %c0_i32_1 = arith.constant 0 : i32
    return %c0_i32, %c0_i32_0 : i32, i32
  }
  func.func @transform_10(%arg0: i32) -> (i32, i32) {
    %c0_i32 = arith.constant 0 : i32
    %c0_i32_0 = arith.constant 0 : i32
    return %arg0, %c0_i32 : i32, i32
  }
  func.func @transform_11(%arg0: i32) -> (i32, i32) {
    %c0_i32 = arith.constant 0 : i32
    %c0_i32_0 = arith.constant 0 : i32
    return %arg0, %c0_i32 : i32, i32
  }
}

</mosaic_0001>

<llo_original>
// kernel: tpu_custom_call.1
$region0: #{tpu_custom_call.1}
  #allocation0 [shape = 'u32[]', space=smem, size = 0x4, offset = 0x4, fixed_abs, tag = 'smem constant byte address 0x4 - core index']
  #allocation1 [shape = 'u32[144,128]{1,0:T(1,128)}', space=vmem, size = 0x12000, scoped, tag = 'internal scratch']
  %s0 = inlined_call_operand.vmem [shape: f32[2,128], index: 0, kind: input, shape index: {}]
  %s1 = inlined_call_operand.vmem [shape: f32[2,32], index: 1, kind: input, shape index: {}]
  %s2 = inlined_call_operand.vmem [shape: f32[128,256], index: 2, kind: input, shape index: {}]
  %s3 = inlined_call_operand.vmem [shape: f32[1,256], index: 3, kind: input, shape index: {}]
  %s4 = inlined_call_operand.vmem [shape: f32[32,16], index: 4, kind: input, shape index: {}]
  %s5 = inlined_call_operand.vmem [shape: f32[1,16], index: 5, kind: input, shape index: {}]
  %s6 = inlined_call_operand.vmem [shape: f32[16,256], index: 6, kind: input, shape index: {}]
  %s7 = inlined_call_operand.vmem [shape: f32[256,16], index: 7, kind: input, shape index: {}]
  %s8 = inlined_call_operand.vmem [shape: f32[16,128], index: 8, kind: input, shape index: {}]
  %s9 = inlined_call_operand.vmem [shape: f32[128,8], index: 9, kind: input, shape index: {}]
  %s10 = inlined_call_operand.hbm [shape: f32[2,8], index: 10, kind: output, shape index: {0}]
  %s11 = inlined_call_operand.hbm [shape: f32[2,16], index: 11, kind: output, shape index: {1}]
  %12 = xla_tuple %s10, %s11
  %s13 = sld [smem:[#allocation0]]
  $region58: #{tpu_custom_call.1} parent=0
    _
  %s15 = ssub.s32 1, %s13
  %s16 = scalar_select 0, %s15, %s13
  $region1: #{tpu_custom_call.1} parent=0
    #allocation2 [shape = 'u8[1024]{0}', space=vmem, size = 0x400, scoped, tag = 'output window, operand 0, single buffered']
    #allocation3 [shape = 's32[1]{0}', space=sflag, size = 0x4, scoped, tag = 'scoped memory for tpu_custom_call.1']
    #allocation4 [shape = 'u8[1024]{0}', space=vmem, size = 0x400, scoped, tag = 'output window, operand 1, single buffered']
    #allocation5 [shape = 's32[1]{0}', space=sflag, size = 0x4, scoped, tag = 'scoped memory for tpu_custom_call.1']
    %17 = vsyncpa [#allocation3], 0
    %18 = vsyncpa [#allocation5], 0
    // Predicated region
    $region2: #{tpu_custom_call.1} parent=1 // pred_check
      _
    $region3: #{tpu_custom_call.1} parent=1 // pred_check_branch
      %20 = sbr.rel (0) target = $region5
    $region4: #{tpu_custom_call.1} parent=1 // pred_region
      _
    $region5: #{tpu_custom_call.1} parent=1 // pred_fallthru
      _
    // Predicated region
    $region6: #{tpu_custom_call.1} parent=1 // pred_check
      _
    $region7: #{tpu_custom_call.1} parent=1 // pred_check_branch
      %22 = sbr.rel (0) target = $region9
    $region8: #{tpu_custom_call.1} parent=1 // pred_region
      _
    $region9: #{tpu_custom_call.1} parent=1 // pred_fallthru
      _
    // Predicated region
    $region10: #{tpu_custom_call.1} parent=1 // pred_check
      _
    $region11: #{tpu_custom_call.1} parent=1 // pred_check_branch
      %24 = sbr.rel (0) target = $region13
    $region12: #{tpu_custom_call.1} parent=1 // pred_region
      _
    $region13: #{tpu_custom_call.1} parent=1 // pred_fallthru
      _
    // Predicated region
    $region14: #{tpu_custom_call.1} parent=1 // pred_check
      _
    $region15: #{tpu_custom_call.1} parent=1 // pred_check_branch
      %26 = sbr.rel (0) target = $region17
    $region16: #{tpu_custom_call.1} parent=1 // pred_region
      _
    $region17: #{tpu_custom_call.1} parent=1 // pred_fallthru
      _
    // Predicated region
    $region18: #{tpu_custom_call.1} parent=1 // pred_check
      _
    $region19: #{tpu_custom_call.1} parent=1 // pred_check_branch
      %28 = sbr.rel (0) target = $region21
    $region20: #{tpu_custom_call.1} parent=1 // pred_region
      _
    $region21: #{tpu_custom_call.1} parent=1 // pred_fallthru
      _
    // Predicated region
    $region22: #{tpu_custom_call.1} parent=1 // pred_check
      _
    $region23: #{tpu_custom_call.1} parent=1 // pred_check_branch
      %30 = sbr.rel (0) target = $region25
    $region24: #{tpu_custom_call.1} parent=1 // pred_region
      _
    $region25: #{tpu_custom_call.1} parent=1 // pred_fallthru
      _
    // Predicated region
    $region26: #{tpu_custom_call.1} parent=1 // pred_check
      _
    $region27: #{tpu_custom_call.1} parent=1 // pred_check_branch
      %32 = sbr.rel (0) target = $region29
    $region28: #{tpu_custom_call.1} parent=1 // pred_region
      _
    $region29: #{tpu_custom_call.1} parent=1 // pred_fallthru
      _
    // Predicated region
    $region30: #{tpu_custom_call.1} parent=1 // pred_check
      _
    $region31: #{tpu_custom_call.1} parent=1 // pred_check_branch
      %34 = sbr.rel (0) target = $region33
    $region32: #{tpu_custom_call.1} parent=1 // pred_region
      _
    $region33: #{tpu_custom_call.1} parent=1 // pred_fallthru
      _
    // Predicated region
    $region34: #{tpu_custom_call.1} parent=1 // pred_check
      _
    $region35: #{tpu_custom_call.1} parent=1 // pred_check_branch
      %36 = sbr.rel (0) target = $region37
    $region36: #{tpu_custom_call.1} parent=1 // pred_region
      _
    $region37: #{tpu_custom_call.1} parent=1 // pred_fallthru
      _
    // Predicated region
    $region38: #{tpu_custom_call.1} parent=1 // pred_check
      _
    $region39: #{tpu_custom_call.1} parent=1 // pred_check_branch
      %38 = sbr.rel (0) target = $region41
    $region40: #{tpu_custom_call.1} parent=1 // pred_region
      _
    $region41: #{tpu_custom_call.1} parent=1 // pred_fallthru
      _
    %v39 = vld [vmem:[%s0] sm:$0x3]
    %v40 = vld [vmem:[%s1] sm:$0x3]
    %v41 = vld [vmem:[%s4] sm:$0xff]
    %v42 = vld [vmem:[%s4 + $0x8] sm:$0xff]
    %v43 = vld [vmem:[%s4 + $0x10] sm:$0xff]
    %v44 = vld [vmem:[%s4 + $0x18] sm:$0xff]
    %v45 = vld [vmem:[%s5] sm:$0x1]
    %v47 = vlaneseq
    %v48 = vshrl.u32 %v47, 7
    %v49 = vsub.s32 0, %v48
    %v50 = vrot.slane %v45, %v49
    %vm52 = vcmask 261120
    %v54 = vsel %vm52, %v40, 0
    %56 = vmatprep.subr.mxu0 0.0
    %57 = vmatpush1.msra.mxu0 %v41
    %58 = vmatprep.subr.mxu0 0.0
    %59 = vmatpush1.msra.mxu0 %v42
    %60 = vmatprep.subr.mxu0 0.0
    %61 = vmatpush1.msra.mxu0 %v43
    %62 = vmatprep.subr.mxu0 0.0
    %63 = vmatpush1.msra.mxu0 %v44
    %64 = vmatprep.subr.mxu0 0.0
    %65 = vmatpush1.msra.mxu0 0.0
    %66 = vmatprep.subr.mxu0 0.0
    %67 = vmatpush1.msra.mxu0 0.0
    %68 = vmatprep.subr.mxu0 0.0
    %69 = vmatpush1.msra.mxu0 0.0
    %70 = vmatprep.subr.mxu0 0.0
    %71 = vmatpush1.msra.mxu0 0.0
    %72 = vmatprep.subr.mxu0 0.0
    %73 = vmatpush1.msra.mxu0 0.0
    %74 = vmatprep.subr.mxu0 0.0
    %75 = vmatpush1.msra.mxu0 0.0
    %76 = vmatprep.subr.mxu0 0.0
    %77 = vmatpush1.msra.mxu0 0.0
    %78 = vmatprep.subr.mxu0 0.0
    %79 = vmatpush1.msra.mxu0 0.0
    %80 = vmatprep.subr.mxu0 0.0
    %81 = vmatpush1.msra.mxu0 0.0
    %82 = vmatprep.subr.mxu0 0.0
    %83 = vmatpush1.msra.mxu0 0.0
    %84 = vmatprep.subr.mxu0 0.0
    %85 = vmatpush1.msra.mxu0 0.0
    %86 = vmatprep.subr.mxu0 0.0
    %87 = vmatpush1.msra.mxu0 0.0
    %88 = vmatprep.subr.mxu0 0.0
    %89 = vmatpush1.msra.mxu0 0.0
    %90 = vmatprep.subr.mxu0 0.0
    %91 = vmatpush1.msra.mxu0 0.0
    %92 = vmatprep.subr.mxu0 0.0
    %93 = vmatpush1.msra.mxu0 0.0
    %94 = vmatprep.subr.mxu0 0.0
    %95 = vmatpush1.msra.mxu0 0.0
    %96 = vmatprep.subr.mxu0 0.0
    %97 = vmatpush1.msra.mxu0 0.0
    %98 = vmatprep.subr.mxu0 0.0
    %99 = vmatpush1.msra.mxu0 0.0
    %100 = vmatprep.subr.mxu0 0.0
    %101 = vmatpush1.msra.mxu0 0.0
    %102 = vmatprep.subr.mxu0 0.0
    %103 = vmatpush1.msra.mxu0 0.0
    %104 = vmatprep.subr.mxu0 0.0
    %105 = vmatpush1.msra.mxu0 0.0
    %106 = vmatprep.subr.mxu0 0.0
    %107 = vmatpush1.msra.mxu0 0.0
    %108 = vmatprep.subr.mxu0 0.0
    %109 = vmatpush1.msra.mxu0 0.0
    %110 = vmatprep.subr.mxu0 0.0
    %111 = vmatpush1.msra.mxu0 0.0
    %112 = vmatprep.subr.mxu0 0.0
    %113 = vmatpush1.msra.mxu0 0.0
    %114 = vmatprep.subr.mxu0 0.0
    %115 = vmatpush1.msra.mxu0 0.0
    %116 = vmatprep.subr.mxu0 0.0
    %117 = vmatpush1.msra.mxu0 0.0
    %118 = vmatprep.subr.mxu0 0.0
    %119 = vmatpush1.msra.mxu0 0.0
    %120 = vmatprep.mubr.f32.mxu0 0.0
    %121 = vmatmul.mubr.f32.gmra.mrb[0].mxu0 %v54
    %v122 = vpop.f32.mrb[0].mxu0
    %v123 = vadd.f32 %v50, %v122
    %v124 = vpop.f32.mrb[0].mxu0
    %125 = vdwg.mxu0
    %v126 = vld [vmem:[%s2] sm:$0xff]
    %v127 = vld [vmem:[%s2 + $0x8] sm:$0xff]
    %v128 = vld [vmem:[%s2 + $0x10] sm:$0xff]
    %v129 = vld [vmem:[%s2 + $0x18] sm:$0xff]
    %v130 = vld [vmem:[%s2 + $0x20] sm:$0xff]
    %v131 = vld [vmem:[%s2 + $0x28] sm:$0xff]
    %v132 = vld [vmem:[%s2 + $0x30] sm:$0xff]
    %v133 = vld [vmem:[%s2 + $0x38] sm:$0xff]
    %v134 = vld [vmem:[%s2 + $0x40] sm:$0xff]
    %v135 = vld [vmem:[%s2 + $0x48] sm:$0xff]
    %v136 = vld [vmem:[%s2 + $0x50] sm:$0xff]
    %v137 = vld [vmem:[%s2 + $0x58] sm:$0xff]
    %v138 = vld [vmem:[%s2 + $0x60] sm:$0xff]
    %v139 = vld [vmem:[%s2 + $0x68] sm:$0xff]
    %v140 = vld [vmem:[%s2 + $0x70] sm:$0xff]
    %v141 = vld [vmem:[%s2 + $0x78] sm:$0xff]
    %v142 = vld [vmem:[%s2 + $0x80] sm:$0xff]
    %v143 = vld [vmem:[%s2 + $0x88] sm:$0xff]
    %v144 = vld [vmem:[%s2 + $0x90] sm:$0xff]
    %v145 = vld [vmem:[%s2 + $0x98] sm:$0xff]
    %v146 = vld [vmem:[%s2 + $0xa0] sm:$0xff]
    %v147 = vld [vmem:[%s2 + $0xa8] sm:$0xff]
    %v148 = vld [vmem:[%s2 + $0xb0] sm:$0xff]
    %v149 = vld [vmem:[%s2 + $0xb8] sm:$0xff]
    %v150 = vld [vmem:[%s2 + $0xc0] sm:$0xff]
    %v151 = vld [vmem:[%s2 + $0xc8] sm:$0xff]
    %v152 = vld [vmem:[%s2 + $0xd0] sm:$0xff]
    %v153 = vld [vmem:[%s2 + $0xd8] sm:$0xff]
    %v154 = vld [vmem:[%s2 + $0xe0] sm:$0xff]
    %v155 = vld [vmem:[%s2 + $0xe8] sm:$0xff]
    %v156 = vld [vmem:[%s2 + $0xf0] sm:$0xff]
    %v157 = vld [vmem:[%s2 + $0xf8] sm:$0xff]
    %v158 = vld [vmem:[%s3] sm:$0x3]
    %v160 = vlaneseq
    %v161 = vshrl.u32 %v160, 7
    %v162 = vsub.s32 0, %v161
    %v163 = vrot.slane %v158, %v162
    %v164 = vlaneseq
    %v165 = vshrl.u32 %v164, 7
    %v166 = vsub.s32 1, %v165
    %v167 = vrot.slane %v158, %v166
    %170 = vmatprep.subr.mxu0 %v127
    %171 = vmatpush1.msra.mxu0 %v126
    %172 = vmatprep.subr.mxu0 %v129
    %173 = vmatpush1.msra.mxu0 %v128
    %174 = vmatprep.subr.mxu0 %v131
    %175 = vmatpush1.msra.mxu0 %v130
    %176 = vmatprep.subr.mxu0 %v133
    %177 = vmatpush1.msra.mxu0 %v132
    %178 = vmatprep.subr.mxu0 %v135
    %179 = vmatpush1.msra.mxu0 %v134
    %180 = vmatprep.subr.mxu0 %v137
    %181 = vmatpush1.msra.mxu0 %v136
    %182 = vmatprep.subr.mxu0 %v139
    %183 = vmatpush1.msra.mxu0 %v138
    %184 = vmatprep.subr.mxu0 %v141
    %185 = vmatpush1.msra.mxu0 %v140
    %186 = vmatprep.subr.mxu0 %v143
    %187 = vmatpush1.msra.mxu0 %v142
    %188 = vmatprep.subr.mxu0 %v145
    %189 = vmatpush1.msra.mxu0 %v144
    %190 = vmatprep.subr.mxu0 %v147
    %191 = vmatpush1.msra.mxu0 %v146
    %192 = vmatprep.subr.mxu0 %v149
    %193 = vmatpush1.msra.mxu0 %v148
    %194 = vmatprep.subr.mxu0 %v151
    %195 = vmatpush1.msra.mxu0 %v150
    %196 = vmatprep.subr.mxu0 %v153
    %197 = vmatpush1.msra.mxu0 %v152
    %198 = vmatprep.subr.mxu0 %v155
    %199 = vmatpush1.msra.mxu0 %v154
    %200 = vmatprep.subr.mxu0 %v157
    %201 = vmatpush1.msra.mxu0 %v156
    %202 = vmatprep.subr.mxu0 0.0
    %203 = vmatpush1.msra.mxu0 0.0
    %204 = vmatprep.subr.mxu0 0.0
    %205 = vmatpush1.msra.mxu0 0.0
    %206 = vmatprep.subr.mxu0 0.0
    %207 = vmatpush1.msra.mxu0 0.0
    %208 = vmatprep.subr.mxu0 0.0
    %209 = vmatpush1.msra.mxu0 0.0
    %210 = vmatprep.subr.mxu0 0.0
    %211 = vmatpush1.msra.mxu0 0.0
    %212 = vmatprep.subr.mxu0 0.0
    %213 = vmatpush1.msra.mxu0 0.0
    %214 = vmatprep.subr.mxu0 0.0
    %215 = vmatpush1.msra.mxu0 0.0
    %216 = vmatprep.subr.mxu0 0.0
    %217 = vmatpush1.msra.mxu0 0.0
    %218 = vmatprep.subr.mxu0 0.0
    %219 = vmatpush1.msra.mxu0 0.0
    %220 = vmatprep.subr.mxu0 0.0
    %221 = vmatpush1.msra.mxu0 0.0
    %222 = vmatprep.subr.mxu0 0.0
    %223 = vmatpush1.msra.mxu0 0.0
    %224 = vmatprep.subr.mxu0 0.0
    %225 = vmatpush1.msra.mxu0 0.0
    %226 = vmatprep.subr.mxu0 0.0
    %227 = vmatpush1.msra.mxu0 0.0
    %228 = vmatprep.subr.mxu0 0.0
    %229 = vmatpush1.msra.mxu0 0.0
    %230 = vmatprep.subr.mxu0 0.0
    %231 = vmatpush1.msra.mxu0 0.0
    %232 = vmatprep.subr.mxu0 0.0
    %233 = vmatpush1.msra.mxu0 0.0
    %234 = vmatprep.mubr.f32.mxu0 0.0
    %235 = vmatmul.mubr.f32.gmra.mrb[0].mxu0 %v39
    %v236 = vpop.f32.mrb[0].mxu0
    %v237 = vadd.f32 %v163, %v236
    %v238 = vpop.f32.mrb[0].mxu0
    %v239 = vadd.f32 %v167, %v238
    %240 = vdwg.mxu0
    %v241 = vld [vmem:[%s6] sm:$0xff]
    %v242 = vld [vmem:[%s6 + $0x8] sm:$0xff]
    %v243 = vld [vmem:[%s6 + $0x10] sm:$0xff]
    %v244 = vld [vmem:[%s6 + $0x18] sm:$0xff]
    %vm245 = vcmask 130048
    %v247 = vsel %vm245, %v123, 0
    %249 = vmatprep.subr.mxu0 %v242
    %250 = vmatpush1.msra.mxu0 %v241
    %251 = vmatprep.subr.mxu0 %v244
    %252 = vmatpush1.msra.mxu0 %v243
    %253 = vmatprep.subr.mxu0 0.0
    %254 = vmatpush1.msra.mxu0 0.0
    %255 = vmatprep.subr.mxu0 0.0
    %256 = vmatpush1.msra.mxu0 0.0
    %257 = vmatprep.subr.mxu0 0.0
    %258 = vmatpush1.msra.mxu0 0.0
    %259 = vmatprep.subr.mxu0 0.0
    %260 = vmatpush1.msra.mxu0 0.0
    %261 = vmatprep.subr.mxu0 0.0
    %262 = vmatpush1.msra.mxu0 0.0
    %263 = vmatprep.subr.mxu0 0.0
    %264 = vmatpush1.msra.mxu0 0.0
    %265 = vmatprep.subr.mxu0 0.0
    %266 = vmatpush1.msra.mxu0 0.0
    %267 = vmatprep.subr.mxu0 0.0
    %268 = vmatpush1.msra.mxu0 0.0
    %269 = vmatprep.subr.mxu0 0.0
    %270 = vmatpush1.msra.mxu0 0.0
    %271 = vmatprep.subr.mxu0 0.0
    %272 = vmatpush1.msra.mxu0 0.0
    %273 = vmatprep.subr.mxu0 0.0
    %274 = vmatpush1.msra.mxu0 0.0
    %275 = vmatprep.subr.mxu0 0.0
    %276 = vmatpush1.msra.mxu0 0.0
    %277 = vmatprep.subr.mxu0 0.0
    %278 = vmatpush1.msra.mxu0 0.0
    %279 = vmatprep.subr.mxu0 0.0
    %280 = vmatpush1.msra.mxu0 0.0
    %281 = vmatprep.subr.mxu0 0.0
    %282 = vmatpush1.msra.mxu0 0.0
    %283 = vmatprep.subr.mxu0 0.0
    %284 = vmatpush1.msra.mxu0 0.0
    %285 = vmatprep.subr.mxu0 0.0
    %286 = vmatpush1.msra.mxu0 0.0
    %287 = vmatprep.subr.mxu0 0.0
    %288 = vmatpush1.msra.mxu0 0.0
    %289 = vmatprep.subr.mxu0 0.0
    %290 = vmatpush1.msra.mxu0 0.0
    %291 = vmatprep.subr.mxu0 0.0
    %292 = vmatpush1.msra.mxu0 0.0
    %293 = vmatprep.subr.mxu0 0.0
    %294 = vmatpush1.msra.mxu0 0.0
    %295 = vmatprep.subr.mxu0 0.0
    %296 = vmatpush1.msra.mxu0 0.0
    %297 = vmatprep.subr.mxu0 0.0
    %298 = vmatpush1.msra.mxu0 0.0
    %299 = vmatprep.subr.mxu0 0.0
    %300 = vmatpush1.msra.mxu0 0.0
    %301 = vmatprep.subr.mxu0 0.0
    %302 = vmatpush1.msra.mxu0 0.0
    %303 = vmatprep.subr.mxu0 0.0
    %304 = vmatpush1.msra.mxu0 0.0
    %305 = vmatprep.subr.mxu0 0.0
    %306 = vmatpush1.msra.mxu0 0.0
    %307 = vmatprep.subr.mxu0 0.0
    %308 = vmatpush1.msra.mxu0 0.0
    %309 = vmatprep.subr.mxu0 0.0
    %310 = vmatpush1.msra.mxu0 0.0
    %311 = vmatprep.subr.mxu0 0.0
    %312 = vmatpush1.msra.mxu0 0.0
    %313 = vmatprep.mubr.f32.mxu0 0.0
    %314 = vmatmul.mubr.f32.gmra.mrb[0].mxu0 %v247
    %v315 = vpop.f32.mrb[0].mxu0
    %v316 = vadd.f32 0.0, %v315
    %v317 = vpop.f32.mrb[0].mxu0
    %v318 = vadd.f32 0.0, %v317
    %319 = vdwg.mxu0
    %v320 = vmul.f32 %v237, %v316
    %v321 = vmul.f32 %v239, %v318
    %v322 = vld [vmem:[%s7] sm:$0xff]
    %v323 = vld [vmem:[%s7 + $0x8] sm:$0xff]
    %v324 = vld [vmem:[%s7 + $0x10] sm:$0xff]
    %v325 = vld [vmem:[%s7 + $0x18] sm:$0xff]
    %v326 = vld [vmem:[%s7 + $0x20] sm:$0xff]
    %v327 = vld [vmem:[%s7 + $0x28] sm:$0xff]
    %v328 = vld [vmem:[%s7 + $0x30] sm:$0xff]
    %v329 = vld [vmem:[%s7 + $0x38] sm:$0xff]
    %v330 = vld [vmem:[%s7 + $0x40] sm:$0xff]
    %v331 = vld [vmem:[%s7 + $0x48] sm:$0xff]
    %v332 = vld [vmem:[%s7 + $0x50] sm:$0xff]
    %v333 = vld [vmem:[%s7 + $0x58] sm:$0xff]
    %v334 = vld [vmem:[%s7 + $0x60] sm:$0xff]
    %v335 = vld [vmem:[%s7 + $0x68] sm:$0xff]
    %v336 = vld [vmem:[%s7 + $0x70] sm:$0xff]
    %v337 = vld [vmem:[%s7 + $0x78] sm:$0xff]
    %v338 = vld [vmem:[%s7 + $0x80] sm:$0xff]
    %v339 = vld [vmem:[%s7 + $0x88] sm:$0xff]
    %v340 = vld [vmem:[%s7 + $0x90] sm:$0xff]
    %v341 = vld [vmem:[%s7 + $0x98] sm:$0xff]
    %v342 = vld [vmem:[%s7 + $0xa0] sm:$0xff]
    %v343 = vld [vmem:[%s7 + $0xa8] sm:$0xff]
    %v344 = vld [vmem:[%s7 + $0xb0] sm:$0xff]
    %v345 = vld [vmem:[%s7 + $0xb8] sm:$0xff]
    %v346 = vld [vmem:[%s7 + $0xc0] sm:$0xff]
    %v347 = vld [vmem:[%s7 + $0xc8] sm:$0xff]
    %v348 = vld [vmem:[%s7 + $0xd0] sm:$0xff]
    %v349 = vld [vmem:[%s7 + $0xd8] sm:$0xff]
    %v350 = vld [vmem:[%s7 + $0xe0] sm:$0xff]
    %v351 = vld [vmem:[%s7 + $0xe8] sm:$0xff]
    %v352 = vld [vmem:[%s7 + $0xf0] sm:$0xff]
    %v353 = vld [vmem:[%s7 + $0xf8] sm:$0xff]
    %354 = vmatprep.subr.mxu0 0.0
    %355 = vmatpush1.msra.mxu0 %v322
    %356 = vmatprep.subr.mxu0 0.0
    %357 = vmatpush1.msra.mxu0 %v323
    %358 = vmatprep.subr.mxu0 0.0
    %359 = vmatpush1.msra.mxu0 %v324
    %360 = vmatprep.subr.mxu0 0.0
    %361 = vmatpush1.msra.mxu0 %v325
    %362 = vmatprep.subr.mxu0 0.0
    %363 = vmatpush1.msra.mxu0 %v326
    %364 = vmatprep.subr.mxu0 0.0
    %365 = vmatpush1.msra.mxu0 %v327
    %366 = vmatprep.subr.mxu0 0.0
    %367 = vmatpush1.msra.mxu0 %v328
    %368 = vmatprep.subr.mxu0 0.0
    %369 = vmatpush1.msra.mxu0 %v329
    %370 = vmatprep.subr.mxu0 0.0
    %371 = vmatpush1.msra.mxu0 %v330
    %372 = vmatprep.subr.mxu0 0.0
    %373 = vmatpush1.msra.mxu0 %v331
    %374 = vmatprep.subr.mxu0 0.0
    %375 = vmatpush1.msra.mxu0 %v332
    %376 = vmatprep.subr.mxu0 0.0
    %377 = vmatpush1.msra.mxu0 %v333
    %378 = vmatprep.subr.mxu0 0.0
    %379 = vmatpush1.msra.mxu0 %v334
    %380 = vmatprep.subr.mxu0 0.0
    %381 = vmatpush1.msra.mxu0 %v335
    %382 = vmatprep.subr.mxu0 0.0
    %383 = vmatpush1.msra.mxu0 %v336
    %384 = vmatprep.subr.mxu0 0.0
    %385 = vmatpush1.msra.mxu0 %v337
    %386 = vmatprep.subr.mxu0 0.0
    %387 = vmatpush1.msra.mxu0 %v338
    %388 = vmatprep.subr.mxu0 0.0
    %389 = vmatpush1.msra.mxu0 %v339
    %390 = vmatprep.subr.mxu0 0.0
    %391 = vmatpush1.msra.mxu0 %v340
    %392 = vmatprep.subr.mxu0 0.0
    %393 = vmatpush1.msra.mxu0 %v341
    %394 = vmatprep.subr.mxu0 0.0
    %395 = vmatpush1.msra.mxu0 %v342
    %396 = vmatprep.subr.mxu0 0.0
    %397 = vmatpush1.msra.mxu0 %v343
    %398 = vmatprep.subr.mxu0 0.0
    %399 = vmatpush1.msra.mxu0 %v344
    %400 = vmatprep.subr.mxu0 0.0
    %401 = vmatpush1.msra.mxu0 %v345
    %402 = vmatprep.subr.mxu0 0.0
    %403 = vmatpush1.msra.mxu0 %v346
    %404 = vmatprep.subr.mxu0 0.0
    %405 = vmatpush1.msra.mxu0 %v347
    %406 = vmatprep.subr.mxu0 0.0
    %407 = vmatpush1.msra.mxu0 %v348
    %408 = vmatprep.subr.mxu0 0.0
    %409 = vmatpush1.msra.mxu0 %v349
    %410 = vmatprep.subr.mxu0 0.0
    %411 = vmatpush1.msra.mxu0 %v350
    %412 = vmatprep.subr.mxu0 0.0
    %413 = vmatpush1.msra.mxu0 %v351
    %414 = vmatprep.subr.mxu0 0.0
    %415 = vmatpush1.msra.mxu0 %v352
    %416 = vmatprep.subr.mxu0 0.0
    %417 = vmatpush1.msra.mxu0 %v353
    %418 = vmatprep.mubr.f32.mxu0 %v321
    %419 = vmatmul.mubr.f32.gmra.mrb[0].mxu0 %v320
    %v420 = vpop.f32.mrb[0].mxu0
    %v421 = vadd.f32 0.0, %v420
    %v422 = vpop.f32.mrb[0].mxu0
    %423 = vdwg.mxu0
    %v424 = vmul.f32 %v237, %v237
    %v425 = vmul.f32 %v239, %v239
    %426 = vmatprep.subr.mxu0 0.0
    %427 = vmatpush1.msra.mxu0 %v322
    %428 = vmatprep.subr.mxu0 0.0
    %429 = vmatpush1.msra.mxu0 %v323
    %430 = vmatprep.subr.mxu0 0.0
    %431 = vmatpush1.msra.mxu0 %v324
    %432 = vmatprep.subr.mxu0 0.0
    %433 = vmatpush1.msra.mxu0 %v325
    %434 = vmatprep.subr.mxu0 0.0
    %435 = vmatpush1.msra.mxu0 %v326
    %436 = vmatprep.subr.mxu0 0.0
    %437 = vmatpush1.msra.mxu0 %v327
    %438 = vmatprep.subr.mxu0 0.0
    %439 = vmatpush1.msra.mxu0 %v328
    %440 = vmatprep.subr.mxu0 0.0
    %441 = vmatpush1.msra.mxu0 %v329
    %442 = vmatprep.subr.mxu0 0.0
    %443 = vmatpush1.msra.mxu0 %v330
    %444 = vmatprep.subr.mxu0 0.0
    %445 = vmatpush1.msra.mxu0 %v331
    %446 = vmatprep.subr.mxu0 0.0
    %447 = vmatpush1.msra.mxu0 %v332
    %448 = vmatprep.subr.mxu0 0.0
    %449 = vmatpush1.msra.mxu0 %v333
    %450 = vmatprep.subr.mxu0 0.0
    %451 = vmatpush1.msra.mxu0 %v334
    %452 = vmatprep.subr.mxu0 0.0
    %453 = vmatpush1.msra.mxu0 %v335
    %454 = vmatprep.subr.mxu0 0.0
    %455 = vmatpush1.msra.mxu0 %v336
    %456 = vmatprep.subr.mxu0 0.0
    %457 = vmatpush1.msra.mxu0 %v337
    %458 = vmatprep.subr.mxu0 0.0
    %459 = vmatpush1.msra.mxu0 %v338
    %460 = vmatprep.subr.mxu0 0.0
    %461 = vmatpush1.msra.mxu0 %v339
    %462 = vmatprep.subr.mxu0 0.0
    %463 = vmatpush1.msra.mxu0 %v340
    %464 = vmatprep.subr.mxu0 0.0
    %465 = vmatpush1.msra.mxu0 %v341
    %466 = vmatprep.subr.mxu0 0.0
    %467 = vmatpush1.msra.mxu0 %v342
    %468 = vmatprep.subr.mxu0 0.0
    %469 = vmatpush1.msra.mxu0 %v343
    %470 = vmatprep.subr.mxu0 0.0
    %471 = vmatpush1.msra.mxu0 %v344
    %472 = vmatprep.subr.mxu0 0.0
    %473 = vmatpush1.msra.mxu0 %v345
    %474 = vmatprep.subr.mxu0 0.0
    %475 = vmatpush1.msra.mxu0 %v346
    %476 = vmatprep.subr.mxu0 0.0
    %477 = vmatpush1.msra.mxu0 %v347
    %478 = vmatprep.subr.mxu0 0.0
    %479 = vmatpush1.msra.mxu0 %v348
    %480 = vmatprep.subr.mxu0 0.0
    %481 = vmatpush1.msra.mxu0 %v349
    %482 = vmatprep.subr.mxu0 0.0
    %483 = vmatpush1.msra.mxu0 %v350
    %484 = vmatprep.subr.mxu0 0.0
    %485 = vmatpush1.msra.mxu0 %v351
    %486 = vmatprep.subr.mxu0 0.0
    %487 = vmatpush1.msra.mxu0 %v352
    %488 = vmatprep.subr.mxu0 0.0
    %489 = vmatpush1.msra.mxu0 %v353
    %490 = vmatprep.mubr.f32.mxu0 %v425
    %491 = vmatmul.mubr.f32.gmra.mrb[0].mxu0 %v424
    %v492 = vpop.f32.mrb[0].mxu0
    %v493 = vadd.f32 0.0, %v492
    %v494 = vpop.f32.mrb[0].mxu0
    %495 = vdwg.mxu0
    %v496 = vmul.f32 %v123, %v123
    %vm497 = vcmask 123904
    %v498 = vsel %vm497, %v496, 0.0
    %499 = vadd.xlane.f32.xlu0 %v498
    %v500 = vpop.xlane.xlu0 %499
    %v501 = vrsqrt.pop %v493
    %v502 = vmin.f32 %v501, 1e+08
    %v503 = vrsqrt.pop %v500
    %v504 = vmin.f32 %v503, 1e+08
    %v505 = vmul.f32 %v421, %v502
    %v506 = vmul.f32 %v505, %v504
    %v507 = vsel %vm497, %v506, -inf
    %508 = vmax.xlane.f32.xlu0 %v507
    %v509 = vpop.xlane.xlu0 %508
    %v510 = vsub.f32 %v506, %v509
    %v511 = vmul.f32 %v510, 1.442695
    %v512 = vpow.pop %v511
    %v513 = vsel %vm497, %v512, 0.0
    %514 = vadd.xlane.f32.xlu0 %v513
    %v515 = vpop.xlane.xlu0 %514
    %v516 = vrcp.pop %v515
    %v517 = vmul.f32 %v512, %v516
    %v518 = vld [vmem:[%s8] sm:$0xff]
    %v519 = vld [vmem:[%s8 + $0x8] sm:$0xff]
    %v521 = vsel %vm245, %v517, 0
    %523 = vmatprep.subr.mxu0 0.0
    %524 = vmatpush1.msra.mxu0 %v518
    %525 = vmatprep.subr.mxu0 0.0
    %526 = vmatpush1.msra.mxu0 %v519
    %527 = vmatprep.subr.mxu0 0.0
    %528 = vmatpush1.msra.mxu0 0.0
    %529 = vmatprep.subr.mxu0 0.0
    %530 = vmatpush1.msra.mxu0 0.0
    %531 = vmatprep.subr.mxu0 0.0
    %532 = vmatpush1.msra.mxu0 0.0
    %533 = vmatprep.subr.mxu0 0.0
    %534 = vmatpush1.msra.mxu0 0.0
    %535 = vmatprep.subr.mxu0 0.0
    %536 = vmatpush1.msra.mxu0 0.0
    %537 = vmatprep.subr.mxu0 0.0
    %538 = vmatpush1.msra.mxu0 0.0
    %539 = vmatprep.subr.mxu0 0.0
    %540 = vmatpush1.msra.mxu0 0.0
    %541 = vmatprep.subr.mxu0 0.0
    %542 = vmatpush1.msra.mxu0 0.0
    %543 = vmatprep.subr.mxu0 0.0
    %544 = vmatpush1.msra.mxu0 0.0
    %545 = vmatprep.subr.mxu0 0.0
    %546 = vmatpush1.msra.mxu0 0.0
    %547 = vmatprep.subr.mxu0 0.0
    %548 = vmatpush1.msra.mxu0 0.0
    %549 = vmatprep.subr.mxu0 0.0
    %550 = vmatpush1.msra.mxu0 0.0
    %551 = vmatprep.subr.mxu0 0.0
    %552 = vmatpush1.msra.mxu0 0.0
    %553 = vmatprep.subr.mxu0 0.0
    %554 = vmatpush1.msra.mxu0 0.0
    %555 = vmatprep.subr.mxu0 0.0
    %556 = vmatpush1.msra.mxu0 0.0
    %557 = vmatprep.subr.mxu0 0.0
    %558 = vmatpush1.msra.mxu0 0.0
    %559 = vmatprep.subr.mxu0 0.0
    %560 = vmatpush1.msra.mxu0 0.0
    %561 = vmatprep.subr.mxu0 0.0
    %562 = vmatpush1.msra.mxu0 0.0
    %563 = vmatprep.subr.mxu0 0.0
    %564 = vmatpush1.msra.mxu0 0.0
    %565 = vmatprep.subr.mxu0 0.0
    %566 = vmatpush1.msra.mxu0 0.0
    %567 = vmatprep.subr.mxu0 0.0
    %568 = vmatpush1.msra.mxu0 0.0
    %569 = vmatprep.subr.mxu0 0.0
    %570 = vmatpush1.msra.mxu0 0.0
    %571 = vmatprep.subr.mxu0 0.0
    %572 = vmatpush1.msra.mxu0 0.0
    %573 = vmatprep.subr.mxu0 0.0
    %574 = vmatpush1.msra.mxu0 0.0
    %575 = vmatprep.subr.mxu0 0.0
    %576 = vmatpush1.msra.mxu0 0.0
    %577 = vmatprep.subr.mxu0 0.0
    %578 = vmatpush1.msra.mxu0 0.0
    %579 = vmatprep.subr.mxu0 0.0
    %580 = vmatpush1.msra.mxu0 0.0
    %581 = vmatprep.subr.mxu0 0.0
    %582 = vmatpush1.msra.mxu0 0.0
    %583 = vmatprep.subr.mxu0 0.0
    %584 = vmatpush1.msra.mxu0 0.0
    %585 = vmatprep.subr.mxu0 0.0
    %586 = vmatpush1.msra.mxu0 0.0
    %587 = vmatprep.mubr.f32.mxu0 0.0
    %588 = vmatmul.mubr.f32.gmra.mrb[0].mxu0 %v521
    %v589 = vpop.f32.mrb[0].mxu0
    %v590 = vadd.f32 0.0, %v589
    %v591 = vpop.f32.mrb[0].mxu0
    %592 = vdwg.mxu0
    %v593 = vmul.f32 %v39, %v590
    %v594 = vld [vmem:[%s9] sm:$0xff]
    %v595 = vld [vmem:[%s9 + $0x8] sm:$0xff]
    %v596 = vld [vmem:[%s9 + $0x10] sm:$0xff]
    %v597 = vld [vmem:[%s9 + $0x18] sm:$0xff]
    %v598 = vld [vmem:[%s9 + $0x20] sm:$0xff]
    %v599 = vld [vmem:[%s9 + $0x28] sm:$0xff]
    %v600 = vld [vmem:[%s9 + $0x30] sm:$0xff]
    %v601 = vld [vmem:[%s9 + $0x38] sm:$0xff]
    %v602 = vld [vmem:[%s9 + $0x40] sm:$0xff]
    %v603 = vld [vmem:[%s9 + $0x48] sm:$0xff]
    %v604 = vld [vmem:[%s9 + $0x50] sm:$0xff]
    %v605 = vld [vmem:[%s9 + $0x58] sm:$0xff]
    %v606 = vld [vmem:[%s9 + $0x60] sm:$0xff]
    %v607 = vld [vmem:[%s9 + $0x68] sm:$0xff]
    %v608 = vld [vmem:[%s9 + $0x70] sm:$0xff]
    %v609 = vld [vmem:[%s9 + $0x78] sm:$0xff]
    %610 = vmatprep.subr.mxu0 0.0
    %611 = vmatpush1.msra.mxu0 %v594
    %612 = vmatprep.subr.mxu0 0.0
    %613 = vmatpush1.msra.mxu0 %v595
    %614 = vmatprep.subr.mxu0 0.0
    %615 = vmatpush1.msra.mxu0 %v596
    %616 = vmatprep.subr.mxu0 0.0
    %617 = vmatpush1.msra.mxu0 %v597
    %618 = vmatprep.subr.mxu0 0.0
    %619 = vmatpush1.msra.mxu0 %v598
    %620 = vmatprep.subr.mxu0 0.0
    %621 = vmatpush1.msra.mxu0 %v599
    %622 = vmatprep.subr.mxu0 0.0
    %623 = vmatpush1.msra.mxu0 %v600
    %624 = vmatprep.subr.mxu0 0.0
    %625 = vmatpush1.msra.mxu0 %v601
    %626 = vmatprep.subr.mxu0 0.0
    %627 = vmatpush1.msra.mxu0 %v602
    %628 = vmatprep.subr.mxu0 0.0
    %629 = vmatpush1.msra.mxu0 %v603
    %630 = vmatprep.subr.mxu0 0.0
    %631 = vmatpush1.msra.mxu0 %v604
    %632 = vmatprep.subr.mxu0 0.0
    %633 = vmatpush1.msra.mxu0 %v605
    %634 = vmatprep.subr.mxu0 0.0
    %635 = vmatpush1.msra.mxu0 %v606
    %636 = vmatprep.subr.mxu0 0.0
    %637 = vmatpush1.msra.mxu0 %v607
    %638 = vmatprep.subr.mxu0 0.0
    %639 = vmatpush1.msra.mxu0 %v608
    %640 = vmatprep.subr.mxu0 0.0
    %641 = vmatpush1.msra.mxu0 %v609
    %642 = vmatprep.subr.mxu0 0.0
    %643 = vmatpush1.msra.mxu0 0.0
    %644 = vmatprep.subr.mxu0 0.0
    %645 = vmatpush1.msra.mxu0 0.0
    %646 = vmatprep.subr.mxu0 0.0
    %647 = vmatpush1.msra.mxu0 0.0
    %648 = vmatprep.subr.mxu0 0.0
    %649 = vmatpush1.msra.mxu0 0.0
    %650 = vmatprep.subr.mxu0 0.0
    %651 = vmatpush1.msra.mxu0 0.0
    %652 = vmatprep.subr.mxu0 0.0
    %653 = vmatpush1.msra.mxu0 0.0
    %654 = vmatprep.subr.mxu0 0.0
    %655 = vmatpush1.msra.mxu0 0.0
    %656 = vmatprep.subr.mxu0 0.0
    %657 = vmatpush1.msra.mxu0 0.0
    %658 = vmatprep.subr.mxu0 0.0
    %659 = vmatpush1.msra.mxu0 0.0
    %660 = vmatprep.subr.mxu0 0.0
    %661 = vmatpush1.msra.mxu0 0.0
    %662 = vmatprep.subr.mxu0 0.0
    %663 = vmatpush1.msra.mxu0 0.0
    %664 = vmatprep.subr.mxu0 0.0
    %665 = vmatpush1.msra.mxu0 0.0
    %666 = vmatprep.subr.mxu0 0.0
    %667 = vmatpush1.msra.mxu0 0.0
    %668 = vmatprep.subr.mxu0 0.0
    %669 = vmatpush1.msra.mxu0 0.0
    %670 = vmatprep.subr.mxu0 0.0
    %671 = vmatpush1.msra.mxu0 0.0
    %672 = vmatprep.subr.mxu0 0.0
    %673 = vmatpush1.msra.mxu0 0.0
    %674 = vmatprep.mubr.f32.mxu0 0.0
    %675 = vmatmul.mubr.f32.gmra.mrb[0].mxu0 %v593
    %v676 = vpop.f32.mrb[0].mxu0
    %v677 = vadd.f32 0.0, %v676
    %v678 = vpop.f32.mrb[0].mxu0
    %679 = vdwg.mxu0
    %vm680 = vcmask 58368
    %681 = vst.msk [vmem:[#allocation2] sm:$0x3] %vm680, %v677
    %682 = vst.msk [vmem:[#allocation4] sm:$0x3] %vm497, %v517
    // Predicated region
    $region42: #{tpu_custom_call.1} parent=1 // pred_check
      _
    $region43: #{tpu_custom_call.1} parent=1 // pred_check_branch
      %684 = sbr.rel (0) target = $region45
    $region44: #{tpu_custom_call.1} parent=1 // pred_region
      %s686 = ssub.s32 32, 32
      %687 = vsyncadd [#allocation3], %s686
      %s689 = sshll.u32 [#allocation2], 4
      %s690 = int_to_ptr.vmem [resolvable:$true] %s689
      %692 = dma.vmem_to_hbm [thread:$0]  %s690, 32, %s10, [#allocation3]
    $region45: #{tpu_custom_call.1} parent=1 // pred_fallthru
      _
    // Predicated region
    $region46: #{tpu_custom_call.1} parent=1 // pred_check
      _
    $region47: #{tpu_custom_call.1} parent=1 // pred_check_branch
      %694 = sbr.rel (0) target = $region49
    $region48: #{tpu_custom_call.1} parent=1 // pred_region
      %s696 = ssub.s32 32, 32
      %697 = vsyncadd [#allocation5], %s696
      %s699 = sshll.u32 [#allocation4], 4
      %s700 = int_to_ptr.vmem [resolvable:$true] %s699
      %702 = dma.vmem_to_hbm [thread:$0]  %s700, 32, %s11, [#allocation5]
    $region49: #{tpu_custom_call.1} parent=1 // pred_fallthru
      _
    // Predicated region
    $region50: #{tpu_custom_call.1} parent=1 // pred_check
      _
    $region51: #{tpu_custom_call.1} parent=1 // pred_check_branch
      %704 = sbr.rel (0) target = $region53
    $region52: #{tpu_custom_call.1} parent=1 // pred_region
      %705 = dma.done [#allocation3], 32
    $region53: #{tpu_custom_call.1} parent=1 // pred_fallthru
      _
    // Predicated region
    $region54: #{tpu_custom_call.1} parent=1 // pred_check
      _
    $region55: #{tpu_custom_call.1} parent=1 // pred_check_branch
      %707 = sbr.rel (0) target = $region57
    $region56: #{tpu_custom_call.1} parent=1 // pred_region
      %708 = dma.done [#allocation5], 32
    $region57: #{tpu_custom_call.1} parent=1 // pred_fallthru
      _
    %709 = vsyncpa [#allocation3], 1
    %710 = vsyncpa [#allocation5], 1

</llo_original>
